<compile_context>
chip_gen: v5e
topology: v5e:2x2
jax: 0.10.0
libtpu: 0.0.40
codegen_flags: <defaults>
</compile_context>

<pallas_src>
import jax
import jax.numpy as jnp
from jax import lax
from jax.experimental import pallas as pl
from jax.experimental.pallas import tpu as pltpu


def _round_up(x, m):
    return ((x + m - 1) // m) * m


def _vmem_budget_bytes():
    """Generation-aware (tile budget, scoped-VMEM limit) in bytes.

    v5e/v6e: 128 MiB physical VMEM -> ~56 MiB tile budget / 64 MiB scoped limit.
    v7x:      64 MiB per TensorCore -> ~40 MiB tile budget / 48 MiB scoped limit.
    """
    try:
        cap = pltpu.get_tpu_info().vmem_capacity_bytes
    except Exception:
        cap = 64 * 1024 * 1024
    if cap >= 100 * 1024 * 1024:
        return 56 * 1024 * 1024, 64 * 1024 * 1024
    return 40 * 1024 * 1024, 48 * 1024 * 1024


# ---------------------------------------------------------------------------
# Kernel 1: x = input @ W   (bf16 MXU operands, f32 accumulation in the output)
# ---------------------------------------------------------------------------
def _matmul_kernel(x_ref, w_ref, o_ref):
    # Output block index is constant over the k axis, so o_ref stays resident in
    # VMEM across the reduction: accumulate straight into it (f32), no scratch.
    @pl.when(pl.program_id(2) == 0)
    def _():
        o_ref[...] = jnp.zeros_like(o_ref)

    o_ref[...] += jnp.dot(x_ref[...], w_ref[...],
                          preferred_element_type=jnp.float32)


def matmul_pallas(x, w, *, tm=512, tn=512, tk=512, operand_dtype=jnp.bfloat16):
    """x @ w with bf16 MXU operands and f32 accumulation (output is f32)."""
    M, K = x.shape
    D = w.shape[1]

    x = x.astype(operand_dtype)
    w = w.astype(operand_dtype)

    # Full-dim blocks for small dims (always legal); 512 tiles otherwise
    # (512 is a multiple of 256 -> maps cleanly onto the 256x256 MXUs).
    tm = M if M < tm else tm
    tn = D if D < tn else tn
    tk = K if K < tk else tk

    # Only the contraction dim needs zero padding for correctness; M/D boundary
    # blocks are handled by the cdiv grids (out-of-range rows/cols never land in
    # the real output, so no jnp.pad copies of the big operands).
    if K % tk != 0:
        Kp = _round_up(K, tk)
        x = jnp.pad(x, ((0, 0), (0, Kp - K)))
        w = jnp.pad(w, ((0, Kp - K), (0, 0)))
        K = Kp

    gm, gn, gk = pl.cdiv(M, tm), pl.cdiv(D, tn), pl.cdiv(K, tk)
    # v7x megacore: keep >= 2 blocks along the parallel axes when the rows allow
    # (multiple of 16 so bf16 sublane packing stays native).
    if gm * gn == 1 and M >= 32:
        tm = _round_up(pl.cdiv(M, 2), 16)
        gm = pl.cdiv(M, tm)

    return pl.pallas_call(
        _matmul_kernel,
        out_shape=jax.ShapeDtypeStruct((M, D), jnp.float32),
        grid=(gm, gn, gk),
        in_specs=[pl.BlockSpec((tm, tk), lambda i, j, k: (i, k)),
                  pl.BlockSpec((tk, tn), lambda i, j, k: (k, j))],
        out_specs=pl.BlockSpec((tm, tn), lambda i, j, k: (i, j)),
        compiler_params=pltpu.CompilerParams(
            dimension_semantics=("parallel", "parallel", "arbitrary")),
    )(x, w)


# ---------------------------------------------------------------------------
# Kernel 2: per-edge scores, lane-dense layout (edges on the lane axis).
#   inputs xs_t, xd_t: (out_dim, E_pad)  (gathered endpoint features, transposed)
#   norm_e = sqrt(||x_src||^2 * ||x_dst||^2)  -> rsqrt on EUP (+eps NaN guard)
#   h_e    = relu(x_src * x_dst / norm_e)     -> VPU
#   s_e    = sum_d h_e[d] * a[d]              -> VPU mul + XLU sublane reduce
#   s_e    = s_e if s_e > 0 else -9e15
#   output: (1, E_pad) dense lane row.
# ---------------------------------------------------------------------------
def _edge_score_kernel(xs_ref, xd_ref, a_ref, s_ref):
    xs = xs_ref[...]                                      # (D, te)
    xd = xd_ref[...]                                      # (D, te)
    ns = jnp.sum(xs * xs, axis=0, keepdims=True)          # (1, te)
    nd = jnp.sum(xd * xd, axis=0, keepdims=True)          # (1, te)
    # eps guards padded / zero-norm lanes against rsqrt(0) -> inf -> 0*inf NaN.
    inv_norm = lax.rsqrt(ns * nd + jnp.float32(1e-30))    # EUP
    h = jnp.maximum(xs * xd * inv_norm, 0.0)              # relu, VPU
    # (E, D) x (D, 1) matvec as a weighted sublane reduction (MXU left free).
    s = jnp.sum(h * a_ref[...], axis=0, keepdims=True)    # (1, te)
    s_ref[...] = jnp.where(s > 0, s, jnp.float32(-9.0e15))


def edge_scores_pallas(xs_t, xd_t, a):
    """Per-edge scores; inputs are (out_dim, E_pad) with edges lane-dense."""
    D, Ep = xs_t.shape
    # 2 inputs x 2 pipeline buffers x D x te x 4B <= ~12 MiB: fits every
    # generation's default scoped VMEM without raising the limit.
    te = (12 * 1024 * 1024) // (16 * D * 4)
    te = max(128, min((te // 128) * 128, 8192, Ep))
    if te == Ep and Ep >= 256:          # >= 2 blocks for v7x's two TensorCores
        te = _round_up(pl.cdiv(Ep, 2), 128)
    _, vmem_limit = _vmem_budget_bytes()
    return pl.pallas_call(
        _edge_score_kernel,
        out_shape=jax.ShapeDtypeStruct((1, Ep), jnp.float32),
        grid=(pl.cdiv(Ep, te),),
        in_specs=[pl.BlockSpec((D, te), lambda i: (0, i)),
                  pl.BlockSpec((D, te), lambda i: (0, i)),
                  pl.BlockSpec((D, 1), lambda i: (0, 0))],
        out_specs=pl.BlockSpec((1, te), lambda i: (0, i)),
        compiler_params=pltpu.CompilerParams(
            dimension_semantics=("parallel",),
            vmem_limit_bytes=vmem_limit),
    )(xs_t, xd_t, a)


# ---------------------------------------------------------------------------
# Kernel 3: row-tiled masked softmax == torch.sparse.softmax(dim=1).to_dense()
#   Absent entries are encoded as -inf (no separate mask array).  The -9e15
#   sentinel for thresholded-but-present edges stays distinguishable from -inf.
#   Rows with no edges stay exactly zero.  Exact per-row reciprocal: the kernel
#   is memory-bound, so the divide is free and rows sum to exactly 1.
# ---------------------------------------------------------------------------
def _masked_softmax_kernel(s_ref, o_ref):
    s = s_ref[...]                                        # (tm, N)
    neg_inf = jnp.float32(-jnp.inf)
    present = s > neg_inf
    row_max = jnp.max(s, axis=1, keepdims=True)
    safe_max = jnp.where(row_max == neg_inf, 0.0, row_max)   # empty rows
    e = jnp.where(present, jnp.exp(s - safe_max), 0.0)
    denom = jnp.sum(e, axis=1, keepdims=True)
    inv = 1.0 / jnp.where(denom > 0, denom, 1.0)          # exact, one per row
    o_ref[...] = e * inv


def masked_softmax_pallas(scores):
    N, Nc = scores.shape
    budget, vmem_limit = _vmem_budget_bytes()
    # (score tile + out tile) x double-buffering = 16 B per (row, col) element.
    tm = budget // (16 * Nc)
    tm = max(8, (tm // 8) * 8)
    rows8 = _round_up(N, 8)
    tm = min(tm, rows8)
    if tm >= N and N >= 16:            # >= 2 row blocks for v7x's two TCs
        tm = max(8, _round_up(pl.cdiv(N, 2), 8))
    if tm > N:                         # tiny N: single full-dim block
        tm = N
    return pl.pallas_call(
        _masked_softmax_kernel,
        out_shape=jax.ShapeDtypeStruct((N, Nc), jnp.float32),
        grid=(pl.cdiv(N, tm),),
        in_specs=[pl.BlockSpec((tm, Nc), lambda i: (i, 0))],
        out_specs=pl.BlockSpec((tm, Nc), lambda i: (i, 0)),
        compiler_params=pltpu.CompilerParams(
            dimension_semantics=("parallel",),
            vmem_limit_bytes=vmem_limit),
    )(scores)


# ---------------------------------------------------------------------------
# GL_Layer forward (eval mode)
# ---------------------------------------------------------------------------
def gl_layer_forward(inp, edge, W, a):
    # F.dropout with training=False is the identity.
    x = matmul_pallas(inp, W)                             # (N, out_dim), f32

    N = x.shape[0]
    e0 = edge[0, :]
    e1 = edge[1, :]
    E = e0.shape[0]

    # Endpoint features: contiguous ROW gather on x, then one small-slab
    # transpose to the lane-dense (feature, edge) layout the kernel wants
    # (avoids transposing the full (N, D) x and the strided column gather).
    xs_t = jnp.take(x, e0, axis=0).T                      # (out_dim, E)
    xd_t = jnp.take(x, e1, axis=0).T
    Ep = _round_up(E, 128)                                # pad to lane width only
    if Ep != E:
        xs_t = jnp.pad(xs_t, ((0, 0), (0, Ep - E)))
        xd_t = jnp.pad(xd_t, ((0, 0), (0, Ep - E)))
    s = edge_scores_pallas(xs_t, xd_t, a)[0, :E]          # (E,)

    # Single scatter of edge scores into a -inf initialized dense matrix; -inf
    # marks "no edge" so no separate mask array is needed.
    # Precondition (matches a coalesced COO tensor): (e0, e1) pairs are unique.
    S = jnp.full((N, N), -jnp.inf, dtype=jnp.float32).at[e0, e1].set(s)

    A = masked_softmax_pallas(S)                          # (N, N)
    return x, A


# ---------------------------------------------------------------------------
# Pure-JAX references (mirror the PyTorch module) for correctness checking
# ---------------------------------------------------------------------------
def gl_attention_ref(x, edge, a):
    """Reference for the post-projection part (edge scores + sparse softmax)."""
    e0, e1 = edge[0, :], edge[1, :]
    xs, xd = x[e0], x[e1]
    norm = jnp.sqrt(jnp.sum(xs * xs, 1, keepdims=True) *
                    jnp.sum(xd * xd, 1, keepdims=True))
    h = jax.nn.relu(xs * xd / norm)
    s = (h @ a)[:, 0]
    s = jnp.where(s > 0, s, -9.0e15)
    N = x.shape[0]
    S = jnp.zeros((N, N), jnp.float32).at[e0, e1].set(s)
    M = jnp.zeros((N, N), jnp.float32).at[e0, e1].set(1.0)
    row_max = jnp.max(jnp.where(M > 0, S, -jnp.inf), axis=1, keepdims=True)
    safe_max = jnp.where(row_max == -jnp.inf, 0.0, row_max)
    e = jnp.where(M > 0, jnp.exp(S - safe_max), 0.0)
    denom = jnp.sum(e, axis=1, keepdims=True)
    return e / jnp.where(denom > 0, denom, 1.0)


def gl_layer_ref(inp, edge, W, a):
    x = inp @ W
    return x, gl_attention_ref(x, edge, a)


def xavier_normal(key, shape):
    fan_in, fan_out = shape[0], shape[1]
    std = (2.0 / (fan_in + fan_out)) ** 0.5
    return std * jax.random.normal(key, shape, dtype=jnp.float32)


if __name__ == "__main__":
    key = jax.random.PRNGKey(0)
    k_in, k_w, k_a = jax.random.split(key, 3)

    N, in_dim, out_dim = 16, 8, 32

    inp = jax.random.normal(k_in, (N, in_dim), dtype=jnp.float32)
    W = xavier_normal(k_w, (in_dim, out_dim))
    a = xavier_normal(k_a, (out_dim, 1))

    # Deterministic, unique edge list: each node i -> (i+1)%N and (i+5)%N.
    idx = jnp.arange(N, dtype=jnp.int32)
    edge = jnp.stack([jnp.concatenate([idx, idx]),
                      jnp.concatenate([(idx + 1) % N, (idx + 5) % N])])  # (2, 32)

    x_out, A_out = gl_layer_forward(inp, edge, W, a)
    jax.block_until_ready((x_out, A_out))

    # (1) Projection kernel: tight vs an XLA bf16 dot with f32 accumulation
    #     (same operand precision as the kernel), and within bf16 quantization
    #     error of the exact f32 reference.
    x_ref_bf16 = jnp.dot(inp.astype(jnp.bfloat16), W.astype(jnp.bfloat16),
                         preferred_element_type=jnp.float32)
    x_ref_f32 = inp @ W
    assert jnp.allclose(x_out, x_ref_bf16, atol=1e-3, rtol=1e-3)
    assert jnp.allclose(x_out, x_ref_f32, atol=3e-2, rtol=3e-2)

    # (2) Edge-score + masked-softmax kernels: tight check against a pure-JAX
    #     reference run downstream of the SAME projected features (isolates
    #     kernel error from stage-1 bf16 operand quantization).
    A_ref = gl_attention_ref(x_out, edge, a)
    assert jnp.allclose(A_out, A_ref, atol=1e-4, rtol=1e-4)

    # Exact reciprocal in the softmax: every row with edges sums to exactly ~1.
    assert jnp.allclose(A_out.sum(axis=1), 1.0, atol=1e-5)

    print("KERNEL_OK")
</pallas_src>

<mosaic_0001>
module attributes {stable_mosaic.version = 11 : i64} {
  func.func @_matmul_kernel(%arg0: i32, %arg1: i32, %arg2: i32, %arg3: memref<16x8xbf16, #tpu.memory_space<vmem>>, %arg4: memref<8x32xbf16, #tpu.memory_space<vmem>>, %arg5: memref<16x32xf32, #tpu.memory_space<vmem>>) attributes {dimension_semantics = [#tpu.dimension_semantics<parallel>, #tpu.dimension_semantics<parallel>, #tpu.dimension_semantics<arbitrary>], iteration_bounds = array<i64: 1, 1, 1>, scalar_prefetch = 0 : i64, scratch_operands = 0 : i64, tpu.core_type = #tpu.core_type<tc>, window_params = [{transform_indices = @transform_0, window_bounds = array<i64: 16, 8>}, {transform_indices = @transform_1, window_bounds = array<i64: 8, 32>}, {transform_indices = @transform_2, window_bounds = array<i64: 16, 32>}]} {
    %c0_i32 = arith.constant 0 : i32
    %0 = arith.cmpi eq, %arg2, %c0_i32 : i32
    %1 = arith.extui %0 : i1 to i32
    %c0_i32_0 = arith.constant 0 : i32
    %2 = arith.cmpi ne, %1, %c0_i32_0 : i32
    scf.if %2 {
      %cst_8 = arith.constant 0.000000e+00 : f32
      %9 = vector.broadcast %cst_8 : f32 to vector<16x32xf32>
      %c0_9 = arith.constant 0 : index
      %c0_10 = arith.constant 0 : index
      %10 = vector.load %arg5[%c0_9, %c0_10] : memref<16x32xf32, #tpu.memory_space<vmem>>, vector<16x32xf32>
      tpu.vector_store %arg5[%c0_9, %c0_10], %9 {strides = array<i32>} : memref<16x32xf32, #tpu.memory_space<vmem>>, vector<16x32xf32>,
    } else {
    }
    %c0 = arith.constant 0 : index
    %c0_1 = arith.constant 0 : index
    %3 = vector.load %arg5[%c0, %c0_1] : memref<16x32xf32, #tpu.memory_space<vmem>>, vector<16x32xf32>
    %c0_2 = arith.constant 0 : index
    %c0_3 = arith.constant 0 : index
    %4 = vector.load %arg3[%c0_2, %c0_3] : memref<16x8xbf16, #tpu.memory_space<vmem>>, vector<16x8xbf16>
    %c0_4 = arith.constant 0 : index
    %c0_5 = arith.constant 0 : index
    %5 = vector.load %arg4[%c0_4, %c0_5] : memref<8x32xbf16, #tpu.memory_space<vmem>>, vector<8x32xbf16>
    %cst = arith.constant dense<0.000000e+00> : vector<16x32xf32>
    %6 = tpu.matmul %4, %5, %cst {dimension_numbers = #tpu.dot_dimension_numbers<[1], [0], [0], [1], [0, 0, 1, 1], [], []>} : vector<16x8xbf16>, vector<8x32xbf16>, vector<16x32xf32> -> vector<16x32xf32>
    %7 = arith.addf %3, %6 : vector<16x32xf32>
    %c0_6 = arith.constant 0 : index
    %c0_7 = arith.constant 0 : index
    %8 = vector.load %arg5[%c0_6, %c0_7] : memref<16x32xf32, #tpu.memory_space<vmem>>, vector<16x32xf32>
    tpu.vector_store %arg5[%c0_6, %c0_7], %7 {strides = array<i32>} : memref<16x32xf32, #tpu.memory_space<vmem>>, vector<16x32xf32>,
    return
  }
  func.func @transform_0(%arg0: i32, %arg1: i32, %arg2: i32) -> (i32, i32) {
    %c0_i32 = arith.constant 0 : i32
    return %arg0, %arg2 : i32, i32
  }
  func.func @transform_1(%arg0: i32, %arg1: i32, %arg2: i32) -> (i32, i32) {
    %c0_i32 = arith.constant 0 : i32
    return %arg2, %arg1 : i32, i32
  }
  func.func @transform_2(%arg0: i32, %arg1: i32, %arg2: i32) -> (i32, i32) {
    %c0_i32 = arith.constant 0 : i32
    return %arg0, %arg1 : i32, i32
  }
}

</mosaic_0001>

<llo_original>
// kernel: tpu_custom_call.1
$region0: #{tpu_custom_call.1}
  #allocation0 [shape = 'u32[]', space=smem, size = 0x4, offset = 0x4, fixed_abs, tag = 'smem constant byte address 0x4 - core index']
  #allocation1 [shape = 'u32[72,128]{1,0:T(1,128)}', space=vmem, size = 0x9000, scoped, tag = 'internal scratch']
  %s0 = inlined_call_operand.vmem [shape: bf16[16,8], index: 0, kind: input, shape index: {}]
  %s1 = inlined_call_operand.vmem [shape: bf16[8,32], index: 1, kind: input, shape index: {}]
  %s2 = inlined_call_operand.hbm [shape: f32[16,32], index: 2, kind: output, shape index: {}]
  %s3 = sld [smem:[#allocation0]]
  $region22: #{tpu_custom_call.1} parent=0
    _
  %s5 = ssub.s32 1, %s3
  %s6 = scalar_select 0, %s5, %s3
  $region1: #{tpu_custom_call.1} parent=0
    #allocation2 [shape = 'u8[8192]{0}', space=vmem, size = 0x2000, scoped, tag = 'output window, operand 0, single buffered']
    #allocation3 [shape = 's32[1]{0}', space=sflag, size = 0x4, scoped, tag = 'scoped memory for tpu_custom_call.1']
    %7 = vsyncpa [#allocation3], 0
    // Predicated region
    $region2: #{tpu_custom_call.1} parent=1 // pred_check
      _
    $region3: #{tpu_custom_call.1} parent=1 // pred_check_branch
      %9 = sbr.rel (0) target = $region5
    $region4: #{tpu_custom_call.1} parent=1 // pred_region
      _
    $region5: #{tpu_custom_call.1} parent=1 // pred_fallthru
      _
    // Predicated region
    $region6: #{tpu_custom_call.1} parent=1 // pred_check
      _
    $region7: #{tpu_custom_call.1} parent=1 // pred_check_branch
      %11 = sbr.rel (0) target = $region9
    $region8: #{tpu_custom_call.1} parent=1 // pred_region
      _
    $region9: #{tpu_custom_call.1} parent=1 // pred_fallthru
      _
    %p13 = scmp.eq.s32.totalorder 0, 0
    // Predicated region
    $region10: #{tpu_custom_call.1} parent=1 // pred_check
      %p14 = pneg %p13
    $region11: #{tpu_custom_call.1} parent=1 // pred_check_branch
      %16 = sbr.rel (%p14) target = $region13
    $region12: #{tpu_custom_call.1} parent=1 // pred_region
      %vm17 = vcmask 261120
      %18 = vst.msk [vmem:[#allocation2] sm:$0xff] %vm17, 0.0
      %19 = vst.msk [vmem:[#allocation2 + $0x8] sm:$0xff] %vm17, 0.0
    $region13: #{tpu_custom_call.1} parent=1 // pred_fallthru
      _
    %v20 = vld [vmem:[#allocation2] sm:$0xff]
    %v21 = vld [vmem:[#allocation2 + $0x8] sm:$0xff]
    %v22 = vld [vmem:[%s0] sm:$0xf]
    %v23 = vld [vmem:[%s0 + $0x4] sm:$0xf]
    %v24 = vld [vmem:[%s1] sm:$0xf]
    %v27 = vunpack.c.l.b16 %v22
    %v28 = vunpack.c.l.b16 %v23
    %v29 = vpack.c.b16 %v28, %v27
    %vm30 = vcmask 64512
    %v32 = vsel %vm30, %v29, 0
    %vm34 = vcmask 1043456
    %v36 = vsel %vm34, %v24, 0
    %38 = vmatpush.bf16.msra.mxu0 0
    %39 = vmatpush.bf16.msra.mxu0 0
    %40 = vmatpush.bf16.msra.mxu0 0
    %41 = vmatpush.bf16.msra.mxu0 0
    %42 = vmatpush.bf16.msra.mxu0 0
    %43 = vmatpush.bf16.msra.mxu0 0
    %44 = vmatpush.bf16.msra.mxu0 0
    %45 = vmatpush.bf16.msra.mxu0 %v36
    %46 = vmatmul.bf16.gmra.mxu0 %v32
    %v47 = vpop.f32.mrf.mxu0
    %v48 = vadd.f32 0.0, %v47
    %v49 = vpop.f32.mrf.mxu0
    %v50 = vadd.f32 0.0, %v49
    %51 = vdwg.mxu0
    %v52 = vadd.f32 %v20, %v48
    %v53 = vadd.f32 %v21, %v50
    %vm54 = vcmask 261120
    %55 = vst.msk [vmem:[#allocation2] sm:$0xff] %vm54, %v52
    %56 = vst.msk [vmem:[#allocation2 + $0x8] sm:$0xff] %vm54, %v53
    // Predicated region
    $region14: #{tpu_custom_call.1} parent=1 // pred_check
      _
    $region15: #{tpu_custom_call.1} parent=1 // pred_check_branch
      %58 = sbr.rel (0) target = $region17
    $region16: #{tpu_custom_call.1} parent=1 // pred_region
      %60 = vsyncadd [#allocation3], 0
      %s61 = sshll.u32 [#allocation2], 4
      %s62 = int_to_ptr.vmem [resolvable:$true] %s61
      %s63 = sshll.u32 %s2, 4
      %s64 = int_to_ptr.hbm [resolvable:$true] %s63
      %69 = dma.vmem_to_hbm [thread:$0]  %s62, 256, %s64, [#allocation3], 128, 128, 8
    $region17: #{tpu_custom_call.1} parent=1 // pred_fallthru
      _
    // Predicated region
    $region18: #{tpu_custom_call.1} parent=1 // pred_check
      _
    $region19: #{tpu_custom_call.1} parent=1 // pred_check_branch
      %71 = sbr.rel (0) target = $region21
    $region20: #{tpu_custom_call.1} parent=1 // pred_region
      %73 = dma.done [#allocation3], 256
    $region21: #{tpu_custom_call.1} parent=1 // pred_fallthru
      _
    %74 = vsyncpa [#allocation3], 1

</llo_original>
